<compile_context>
chip_gen: v7x
topology: tpu7x:2x2x1
jax: 0.10.0
libtpu: 0.0.40
codegen_flags: <defaults>
</compile_context>

<pallas_src>
import math

import jax
import jax.numpy as jnp
from jax.experimental import pallas as pl
from jax.experimental.pallas import tpu as pltpu


_ACTIVATIONS = {
    "tanh": jnp.tanh,
    "sigmoid": jax.nn.sigmoid,
    "swish": jax.nn.silu,
    "silu": jax.nn.silu,
    "elu": jax.nn.elu,
    "gelu": jax.nn.gelu,
    "relu": jax.nn.relu,
    "leakyrelu": lambda v: jax.nn.leaky_relu(v, 0.01),
}


def _make_mlp_kernel(modes, act_name):
    """modes: per-layer static mode tag ('fma' | 'reduce' | 'mxu')."""
    act = _ACTIVATIONS[act_name.lower()]

    def kernel(x_ref, *refs):
        # refs = (w1, b1, w2, b2, ..., out_ref)
        o_ref = refs[-1]
        wb = refs[:-1]
        n_layers = len(modes)

        h = x_ref[...]  # (d_in, tile_n), batch on lanes
        for l, mode in enumerate(modes):
            w_ref = wb[2 * l]
            b_ref = wb[2 * l + 1]
            if mode == "fma":
                # Tiny-K first layer: pure VPU broadcast-FMA.
                # w_ref: (d_in, H_pad, tile_n) pre-broadcast, b_ref: (H_pad, tile_n).
                acc = b_ref[...]
                for k in range(h.shape[0]):
                    acc = acc + w_ref[k] * h[k : k + 1, :]
                h = acc
            elif mode == "reduce":
                # d_out == 1 layer: VPU multiply + sublane reduce (XLU), no MXU.
                # w_ref: (K_pad, tile_n) pre-broadcast, b_ref: (1, tile_n).
                h = jnp.sum(w_ref[...] * h, axis=0, keepdims=True) + b_ref[...]
            else:  # "mxu"
                # General layer: (do, K) @ (K, tile_n) on the MXU, bias pre-broadcast.
                h = (
                    jnp.dot(w_ref[...], h, preferred_element_type=jnp.float32)
                    .astype(h.dtype)
                    + b_ref[...]
                )
            if l < n_layers - 1:
                h = act(h)
        o_ref[...] = h.astype(o_ref.dtype)

    return kernel


def pinn_forward(
    x,
    params,
    *,
    activation="tanh",
    tile_n=2048,
    min_grid_steps=1,          # set to 2 on v7x so both TensorCores get a tile
    compute_dtype=jnp.float32, # bfloat16 is ~2x on v6e/v7x; keep f32 on v5e
    vmem_limit_bytes=None,     # set explicitly on v5e for large configs (16 MiB scoped default)
):
    """x: (N, d_in). params: list of (W (Din, Dout), b (1, Dout)) per layer."""
    N, d_in = x.shape
    d_out = params[-1][0].shape[1]
    cdt = jnp.dtype(compute_dtype)
    pad_mult = 8 if cdt.itemsize >= 4 else 16  # sublane granularity

    # ---- tile sizing: big tiles, minimal grid (>= min_grid_steps steps) ----
    tile_req = max(128, 128 * (int(tile_n) // 128))
    n128 = pl.cdiv(N, 128) * 128
    steps = max(1, int(min_grid_steps))
    per_step = pl.cdiv(pl.cdiv(n128, steps), 128) * 128
    tile_n = max(128, min(tile_req, per_step))
    n_pad = pl.cdiv(N, tile_n) * tile_n
    grid = n_pad // tile_n

    # Batch on lanes: x^T, zero-padded lanes are sliced off at the end.
    x_t = jnp.zeros((d_in, n_pad), cdt).at[:, :N].set(x.astype(cdt).T)

    # Hidden dims padded to sublane granularity; input/output dims exact.
    dims = [d_in] + [w.shape[1] for (w, _) in params]
    pdims = [dims[0]] + [pl.cdiv(d, pad_mult) * pad_mult for d in dims[1:-1]] + [dims[-1]]

    modes = []
    flat_params = []
    in_specs = [pl.BlockSpec((d_in, tile_n), lambda i: (0, i))]
    for l, (w, b) in enumerate(params):
        di, do = pdims[l], pdims[l + 1]
        di_r, do_r = w.shape
        w = w.astype(cdt)

        # Bias pre-broadcast to a lane-dense (do, tile_n) slab (padded rows = 0).
        b_full = jnp.zeros((do,), cdt).at[:do_r].set(b.reshape(-1).astype(cdt))
        b_b = jnp.broadcast_to(b_full[:, None], (do, tile_n))

        if l == 0 and di <= 4:
            # Degenerate-K first layer -> VPU broadcast-FMA; lane-replicate the
            # weight columns once wrapper-side instead of per tile.
            modes.append("fma")
            w_full = jnp.zeros((di, do), cdt).at[:, :do_r].set(w)
            w_k = jnp.broadcast_to(w_full[:, :, None], (di, do, tile_n))
            w_spec = pl.BlockSpec((di, do, tile_n), lambda i: (0, 0, 0))
        elif do == 1:
            # d_out == 1 layer -> VPU multiply + sublane reduce instead of an
            # M=1 MXU matvec.
            modes.append("reduce")
            w_full = jnp.zeros((di,), cdt).at[:di_r].set(w[:, 0])
            w_k = jnp.broadcast_to(w_full[:, None], (di, tile_n))
            w_spec = pl.BlockSpec((di, tile_n), lambda i: (0, 0))
        else:
            # General layer: torch (out, in) layout on the MXU (K = padded hidden).
            modes.append("mxu")
            w_k = jnp.zeros((do, di), cdt).at[:do_r, :di_r].set(w.T)
            w_spec = pl.BlockSpec((do, di), lambda i: (0, 0))

        flat_params += [w_k, b_b]
        # Constant index maps -> weight/bias slabs stay resident in VMEM.
        in_specs += [w_spec, pl.BlockSpec((do, tile_n), lambda i: (0, 0))]

    out_spec = pl.BlockSpec((d_out, tile_n), lambda i: (0, i))

    out_t = pl.pallas_call(
        _make_mlp_kernel(tuple(modes), activation),
        out_shape=jax.ShapeDtypeStruct((d_out, n_pad), x.dtype),
        grid_spec=pl.GridSpec(
            grid=(grid,),
            in_specs=in_specs,
            out_specs=out_spec,
        ),
        compiler_params=pltpu.CompilerParams(
            dimension_semantics=("parallel",),
            vmem_limit_bytes=vmem_limit_bytes,
        ),
    )(x_t, *flat_params)

    return out_t.T[:N]


def init_params(key, layers_dim):
    """Deterministic init matching torch.nn.Linear's default:
    U(-1/sqrt(fan_in), 1/sqrt(fan_in)) for both weight and bias."""
    params = []
    for d_in, d_out in zip(layers_dim[:-1], layers_dim[1:]):
        key, kw, kb = jax.random.split(key, 3)
        bound = 1.0 / math.sqrt(d_in)
        w = jax.random.uniform(kw, (d_in, d_out), jnp.float32, -bound, bound)
        b = jax.random.uniform(kb, (1, d_out), jnp.float32, -bound, bound)
        params.append((w, b))
    return params


def pinn_reference(x, params, activation="tanh"):
    act = _ACTIVATIONS[activation.lower()]
    h = x
    for l, (w, b) in enumerate(params):
        h = h @ w + b
        if l < len(params) - 1:
            h = act(h)
    return h


if __name__ == "__main__":
    layers_dim = [1, 100, 1]   # module default: Linear(1,100) -> tanh -> Linear(100,1)
    N = 1000                   # collocation points (exercises the ragged batch tail)

    key = jax.random.PRNGKey(0)
    key, kx = jax.random.split(key)
    x = jax.random.uniform(kx, (N, layers_dim[0]), jnp.float32, -1.0, 1.0)

    params = init_params(key, layers_dim)

    # Default tile_n=2048 collapses this N to a single grid step (optimal for
    # single-TC v5e/v6e); on v7x use min_grid_steps=2 to feed both TensorCores.
    out = pinn_forward(x, params)
    out = jax.block_until_ready(out)

    ref = pinn_reference(x, params)
    assert out.shape == (N, layers_dim[-1])
    assert jnp.allclose(out, ref, atol=1e-5, rtol=1e-5), "mismatch vs reference"

    print("KERNEL_OK")
</pallas_src>

<mosaic_0001>
module attributes {stable_mosaic.version = 11 : i64} {
  func.func @kernel(%arg0: i32, %arg1: memref<1x1024xf32, #tpu.memory_space<vmem>>, %arg2: memref<1x104x1024xf32, #tpu.memory_space<vmem>>, %arg3: memref<104x1024xf32, #tpu.memory_space<vmem>>, %arg4: memref<104x1024xf32, #tpu.memory_space<vmem>>, %arg5: memref<1x1024xf32, #tpu.memory_space<vmem>>, %arg6: memref<1x1024xf32, #tpu.memory_space<vmem>>) attributes {dimension_semantics = [#tpu.dimension_semantics<parallel>], iteration_bounds = array<i64: 1>, scalar_prefetch = 0 : i64, scratch_operands = 0 : i64, tpu.core_type = #tpu.core_type<tc>, window_params = [{transform_indices = @transform_0, window_bounds = array<i64: 1, 1024>}, {pipeline_mode = #tpu.pipeline_mode<synchronous>, transform_indices = @transform_1, window_bounds = array<i64: 1, 104, 1024>}, {pipeline_mode = #tpu.pipeline_mode<synchronous>, transform_indices = @transform_2, window_bounds = array<i64: 104, 1024>}, {pipeline_mode = #tpu.pipeline_mode<synchronous>, transform_indices = @transform_3, window_bounds = array<i64: 104, 1024>}, {pipeline_mode = #tpu.pipeline_mode<synchronous>, transform_indices = @transform_4, window_bounds = array<i64: 1, 1024>}, {transform_indices = @transform_5, window_bounds = array<i64: 1, 1024>}]} {
    %c0 = arith.constant 0 : index
    %c0_0 = arith.constant 0 : index
    %0 = vector.load %arg1[%c0, %c0_0] : memref<1x1024xf32, #tpu.memory_space<vmem>>, vector<1x1024xf32>
    %c0_1 = arith.constant 0 : index
    %c0_2 = arith.constant 0 : index
    %1 = vector.load %arg3[%c0_1, %c0_2] : memref<104x1024xf32, #tpu.memory_space<vmem>>, vector<104x1024xf32>
    %c0_3 = arith.constant 0 : index
    %c0_4 = arith.constant 0 : index
    %c0_5 = arith.constant 0 : index
    %2 = vector.load %arg2[%c0_3, %c0_4, %c0_5] : memref<1x104x1024xf32, #tpu.memory_space<vmem>>, vector<1x104x1024xf32>
    %3 = vector.shape_cast %2 : vector<1x104x1024xf32> to vector<104x1024xf32>
    %4 = vector.broadcast %0 : vector<1x1024xf32> to vector<104x1024xf32>
    %5 = arith.mulf %3, %4 : vector<104x1024xf32>
    %6 = arith.addf %1, %5 : vector<104x1024xf32>
    %7 = math.tanh %6 : vector<104x1024xf32>
    %c0_6 = arith.constant 0 : index
    %c0_7 = arith.constant 0 : index
    %8 = vector.load %arg4[%c0_6, %c0_7] : memref<104x1024xf32, #tpu.memory_space<vmem>>, vector<104x1024xf32>
    %9 = arith.mulf %8, %7 : vector<104x1024xf32>
    %cst = arith.constant dense<0.000000e+00> : vector<1024xf32>
    %10 = vector.multi_reduction <add>, %9, %cst [0] : vector<104x1024xf32> to vector<1024xf32>
    %11 = vector.shape_cast %10 : vector<1024xf32> to vector<1x1024xf32>
    %c0_8 = arith.constant 0 : index
    %c0_9 = arith.constant 0 : index
    %12 = vector.load %arg5[%c0_8, %c0_9] : memref<1x1024xf32, #tpu.memory_space<vmem>>, vector<1x1024xf32>
    %13 = arith.addf %11, %12 : vector<1x1024xf32>
    %c0_10 = arith.constant 0 : index
    %c0_11 = arith.constant 0 : index
    %14 = vector.load %arg6[%c0_10, %c0_11] : memref<1x1024xf32, #tpu.memory_space<vmem>>, vector<1x1024xf32>
    tpu.vector_store %arg6[%c0_10, %c0_11], %13 {strides = array<i32>} : memref<1x1024xf32, #tpu.memory_space<vmem>>, vector<1x1024xf32>,
    return
  }
  func.func @transform_0(%arg0: i32) -> (i32, i32) {
    %c0_i32 = arith.constant 0 : i32
    %c0_i32_0 = arith.constant 0 : i32
    return %c0_i32, %arg0 : i32, i32
  }
  func.func @transform_1(%arg0: i32) -> (i32, i32, i32) {
    %c0_i32 = arith.constant 0 : i32
    %c0_i32_0 = arith.constant 0 : i32
    %c0_i32_1 = arith.constant 0 : i32
    %c0_i32_2 = arith.constant 0 : i32
    return %c0_i32, %c0_i32_0, %c0_i32_1 : i32, i32, i32
  }
  func.func @transform_2(%arg0: i32) -> (i32, i32) {
    %c0_i32 = arith.constant 0 : i32
    %c0_i32_0 = arith.constant 0 : i32
    %c0_i32_1 = arith.constant 0 : i32
    return %c0_i32, %c0_i32_0 : i32, i32
  }
  func.func @transform_3(%arg0: i32) -> (i32, i32) {
    %c0_i32 = arith.constant 0 : i32
    %c0_i32_0 = arith.constant 0 : i32
    %c0_i32_1 = arith.constant 0 : i32
    return %c0_i32, %c0_i32_0 : i32, i32
  }
  func.func @transform_4(%arg0: i32) -> (i32, i32) {
    %c0_i32 = arith.constant 0 : i32
    %c0_i32_0 = arith.constant 0 : i32
    %c0_i32_1 = arith.constant 0 : i32
    return %c0_i32, %c0_i32_0 : i32, i32
  }
  func.func @transform_5(%arg0: i32) -> (i32, i32) {
    %c0_i32 = arith.constant 0 : i32
    %c0_i32_0 = arith.constant 0 : i32
    return %c0_i32, %arg0 : i32, i32
  }
}

</mosaic_0001>

<llo_original>
// kernel: tpu_custom_call.1
$region0: #{tpu_custom_call.1}
  #allocation0 [shape = 'u32[]', space=smem, size = 0x4, offset = 0x4, fixed_abs, tag = 'smem constant byte address 0x4 - core index']
  #allocation1 [shape = 'u32[144,128]{1,0:T(1,128)}', space=vmem, size = 0x12000, scoped, tag = 'internal scratch']
  %s0 = inlined_call_operand.hbm [shape: f32[1,1024], index: 0, kind: input, shape index: {}]
  %s1 = inlined_call_operand.hbm [shape: f32[1,104,1024], index: 1, kind: input, shape index: {}]
  %s2 = inlined_call_operand.hbm [shape: f32[104,1024], index: 2, kind: input, shape index: {}]
  %s3 = inlined_call_operand.hbm [shape: f32[104,1024], index: 3, kind: input, shape index: {}]
  %s4 = inlined_call_operand.vmem [shape: f32[1,1024], index: 4, kind: input, shape index: {}]
  %s5 = inlined_call_operand.hbm [shape: f32[1,1024], index: 5, kind: output, shape index: {}]
  %s6 = sld [smem:[#allocation0]]
  $region46: #{tpu_custom_call.1} parent=0
    _
  %s8 = ssub.s32 1, %s6
  %s9 = scalar_select 0, %s8, %s6
  $region1: #{tpu_custom_call.1} parent=0
    #allocation2 [shape = 'u8[4096]{0}', space=vmem, size = 0x1000, scoped, tag = 'input window, operand 0, single buffered']
    #allocation3 [shape = 's32[1]{0}', space=sflag, size = 0x4, scoped, tag = 'scoped memory for tpu_custom_call.1']
    #allocation4 [shape = 's32[1]{0}', space=sflag, size = 0x4, scoped, tag = 'scoped memory for tpu_custom_call.1']
    #allocation5 [shape = 'u8[425984]{0}', space=vmem, size = 0x68000, scoped, tag = 'input window, operand 1, single buffered']
    #allocation6 [shape = 's32[1]{0}', space=sflag, size = 0x4, scoped, tag = 'scoped memory for tpu_custom_call.1']
    #allocation7 [shape = 'u8[425984]{0}', space=vmem, size = 0x68000, scoped, tag = 'input window, operand 2, single buffered']
    #allocation8 [shape = 'u8[425984]{0}', space=vmem, size = 0x68000, scoped, tag = 'input window, operand 3, single buffered']
    #allocation9 [shape = 's32[1]{0}', space=sflag, size = 0x4, scoped, tag = 'scoped memory for tpu_custom_call.1']
    #allocation10 [shape = 'u8[4096]{0}', space=vmem, size = 0x1000, scoped, tag = 'output window, operand 0, single buffered']
    %10 = vsyncpa [#allocation3], 0
    %11 = vsyncpa [#allocation6], 0
    %12 = vsyncpa [#allocation9], 0
    %13 = vsyncpa [#allocation4], 0
    // Predicated region
    $region2: #{tpu_custom_call.1} parent=1 // pred_check
      _
    $region3: #{tpu_custom_call.1} parent=1 // pred_check_branch
      %15 = sbr.rel (0) target = $region5
    $region4: #{tpu_custom_call.1} parent=1 // pred_region
      %s17 = ssub.s32 128, 128
      %18 = vsyncadd [#allocation3], %s17
      %s20 = sshll.u32 [#allocation2], 4
      %s21 = int_to_ptr.vmem [resolvable:$true] %s20
      %23 = dma.hbm_to_vmem [thread:$0]  %s0, 128, %s21, [#allocation3]
    $region5: #{tpu_custom_call.1} parent=1 // pred_fallthru
      _
    // Predicated region
    $region6: #{tpu_custom_call.1} parent=1 // pred_check
      _
    $region7: #{tpu_custom_call.1} parent=1 // pred_check_branch
      %25 = sbr.rel (0) target = $region9
    $region8: #{tpu_custom_call.1} parent=1 // pred_region
      %s27 = ssub.s32 13312, 13312
      %28 = vsyncadd [#allocation6], %s27
      %s29 = sshll.u32 [#allocation5], 4
      %s30 = int_to_ptr.vmem [resolvable:$true] %s29
      %35 = dma.hbm_to_vmem [thread:$0]  %s1, 13312, %s30, [#allocation6], 1024, 1024, 64
    $region9: #{tpu_custom_call.1} parent=1 // pred_fallthru
      _
    // Predicated region
    $region10: #{tpu_custom_call.1} parent=1 // pred_check
      _
    $region11: #{tpu_custom_call.1} parent=1 // pred_check_branch
      %37 = sbr.rel (0) target = $region13
    $region12: #{tpu_custom_call.1} parent=1 // pred_region
      %s39 = ssub.s32 13312, 13312
      %40 = vsyncadd [#allocation6], %s39
      %s41 = sshll.u32 [#allocation7], 4
      %s42 = int_to_ptr.vmem [resolvable:$true] %s41
      %47 = dma.hbm_to_vmem [thread:$0]  %s2, 13312, %s42, [#allocation6], 1024, 1024, 64
    $region13: #{tpu_custom_call.1} parent=1 // pred_fallthru
      _
    // Predicated region
    $region14: #{tpu_custom_call.1} parent=1 // pred_check
      _
    $region15: #{tpu_custom_call.1} parent=1 // pred_check_branch
      %49 = sbr.rel (0) target = $region17
    $region16: #{tpu_custom_call.1} parent=1 // pred_region
      %s51 = ssub.s32 13312, 13312
      %52 = vsyncadd [#allocation9], %s51
      %s53 = sshll.u32 [#allocation8], 4
      %s54 = int_to_ptr.vmem [resolvable:$true] %s53
      %59 = dma.hbm_to_vmem [thread:$0]  %s3, 13312, %s54, [#allocation9], 1024, 1024, 64
    $region17: #{tpu_custom_call.1} parent=1 // pred_fallthru
      _
    // Predicated region
    $region18: #{tpu_custom_call.1} parent=1 // pred_check
      _
    $region19: #{tpu_custom_call.1} parent=1 // pred_check_branch
      %61 = sbr.rel (0) target = $region21
    $region20: #{tpu_custom_call.1} parent=1 // pred_region
      _
    $region21: #{tpu_custom_call.1} parent=1 // pred_fallthru
      _
    // Predicated region
    $region22: #{tpu_custom_call.1} parent=1 // pred_check
      _
    $region23: #{tpu_custom_call.1} parent=1 // pred_check_branch
      %63 = sbr.rel (0) target = $region25
    $region24: #{tpu_custom_call.1} parent=1 // pred_region
      %64 = dma.done [#allocation3], 128
    $region25: #{tpu_custom_call.1} parent=1 // pred_fallthru
      _
    // Predicated region
    $region26: #{tpu_custom_call.1} parent=1 // pred_check
      _
    $region27: #{tpu_custom_call.1} parent=1 // pred_check_branch
      %66 = sbr.rel (0) target = $region29
    $region28: #{tpu_custom_call.1} parent=1 // pred_region
      %67 = dma.done [#allocation6], 13312
    $region29: #{tpu_custom_call.1} parent=1 // pred_fallthru
      _
    // Predicated region
    $region30: #{tpu_custom_call.1} parent=1 // pred_check
      _
    $region31: #{tpu_custom_call.1} parent=1 // pred_check_branch
      %69 = sbr.rel (0) target = $region33
    $region32: #{tpu_custom_call.1} parent=1 // pred_region
      %70 = dma.done [#allocation6], 13312
    $region33: #{tpu_custom_call.1} parent=1 // pred_fallthru
      _
    // Predicated region
    $region34: #{tpu_custom_call.1} parent=1 // pred_check
      _
    $region35: #{tpu_custom_call.1} parent=1 // pred_check_branch
      %72 = sbr.rel (0) target = $region37
    $region36: #{tpu_custom_call.1} parent=1 // pred_region
      %73 = dma.done [#allocation9], 13312
    $region37: #{tpu_custom_call.1} parent=1 // pred_fallthru
      _
    %v74 = vld [vmem:[#allocation2] sm:$0xff]
    %v75 = vld [vmem:[#allocation7] sm:$0xff]
    %v76 = vld [vmem:[#allocation7 + $0x8] sm:$0xff]
    %v77 = vld [vmem:[#allocation7 + $0x10] sm:$0xff]
    %v78 = vld [vmem:[#allocation7 + $0x18] sm:$0xff]
    %v79 = vld [vmem:[#allocation7 + $0x20] sm:$0xff]
    %v80 = vld [vmem:[#allocation7 + $0x28] sm:$0xff]
    %v81 = vld [vmem:[#allocation7 + $0x30] sm:$0xff]
    %v82 = vld [vmem:[#allocation7 + $0x38] sm:$0xff]
    %v83 = vld [vmem:[#allocation7 + $0x40] sm:$0xff]
    %v84 = vld [vmem:[#allocation7 + $0x48] sm:$0xff]
    %v85 = vld [vmem:[#allocation7 + $0x50] sm:$0xff]
    %v86 = vld [vmem:[#allocation7 + $0x58] sm:$0xff]
    %v87 = vld [vmem:[#allocation7 + $0x60] sm:$0xff]
    %v88 = vld [vmem:[#allocation7 + $0x68] sm:$0xff]
    %v89 = vld [vmem:[#allocation7 + $0x70] sm:$0xff]
    %v90 = vld [vmem:[#allocation7 + $0x78] sm:$0xff]
    %v91 = vld [vmem:[#allocation7 + $0x80] sm:$0xff]
    %v92 = vld [vmem:[#allocation7 + $0x88] sm:$0xff]
    %v93 = vld [vmem:[#allocation7 + $0x90] sm:$0xff]
    %v94 = vld [vmem:[#allocation7 + $0x98] sm:$0xff]
    %v95 = vld [vmem:[#allocation7 + $0xa0] sm:$0xff]
    %v96 = vld [vmem:[#allocation7 + $0xa8] sm:$0xff]
    %v97 = vld [vmem:[#allocation7 + $0xb0] sm:$0xff]
    %v98 = vld [vmem:[#allocation7 + $0xb8] sm:$0xff]
    %v99 = vld [vmem:[#allocation7 + $0xc0] sm:$0xff]
    %v100 = vld [vmem:[#allocation7 + $0xc8] sm:$0xff]
    %v101 = vld [vmem:[#allocation7 + $0xd0] sm:$0xff]
    %v102 = vld [vmem:[#allocation7 + $0xd8] sm:$0xff]
    %v103 = vld [vmem:[#allocation7 + $0xe0] sm:$0xff]
    %v104 = vld [vmem:[#allocation7 + $0xe8] sm:$0xff]
    %v105 = vld [vmem:[#allocation7 + $0xf0] sm:$0xff]
    %v106 = vld [vmem:[#allocation7 + $0xf8] sm:$0xff]
    %v107 = vld [vmem:[#allocation7 + $0x100] sm:$0xff]
    %v108 = vld [vmem:[#allocation7 + $0x108] sm:$0xff]
    %v109 = vld [vmem:[#allocation7 + $0x110] sm:$0xff]
    %v110 = vld [vmem:[#allocation7 + $0x118] sm:$0xff]
    %v111 = vld [vmem:[#allocation7 + $0x120] sm:$0xff]
    %v112 = vld [vmem:[#allocation7 + $0x128] sm:$0xff]
    %v113 = vld [vmem:[#allocation7 + $0x130] sm:$0xff]
    %v114 = vld [vmem:[#allocation7 + $0x138] sm:$0xff]
    %v115 = vld [vmem:[#allocation7 + $0x140] sm:$0xff]
    %v116 = vld [vmem:[#allocation7 + $0x148] sm:$0xff]
    %v117 = vld [vmem:[#allocation7 + $0x150] sm:$0xff]
    %v118 = vld [vmem:[#allocation7 + $0x158] sm:$0xff]
    %v119 = vld [vmem:[#allocation7 + $0x160] sm:$0xff]
    %v120 = vld [vmem:[#allocation7 + $0x168] sm:$0xff]
    %v121 = vld [vmem:[#allocation7 + $0x170] sm:$0xff]
    %v122 = vld [vmem:[#allocation7 + $0x178] sm:$0xff]
    %v123 = vld [vmem:[#allocation7 + $0x180] sm:$0xff]
    %v124 = vld [vmem:[#allocation7 + $0x188] sm:$0xff]
    %v125 = vld [vmem:[#allocation7 + $0x190] sm:$0xff]
    %v126 = vld [vmem:[#allocation7 + $0x198] sm:$0xff]
    %v127 = vld [vmem:[#allocation7 + $0x1a0] sm:$0xff]
    %v128 = vld [vmem:[#allocation7 + $0x1a8] sm:$0xff]
    %v129 = vld [vmem:[#allocation7 + $0x1b0] sm:$0xff]
    %v130 = vld [vmem:[#allocation7 + $0x1b8] sm:$0xff]
    %v131 = vld [vmem:[#allocation7 + $0x1c0] sm:$0xff]
    %v132 = vld [vmem:[#allocation7 + $0x1c8] sm:$0xff]
    %v133 = vld [vmem:[#allocation7 + $0x1d0] sm:$0xff]
    %v134 = vld [vmem:[#allocation7 + $0x1d8] sm:$0xff]
    %v135 = vld [vmem:[#allocation7 + $0x1e0] sm:$0xff]
    %v136 = vld [vmem:[#allocation7 + $0x1e8] sm:$0xff]
    %v137 = vld [vmem:[#allocation7 + $0x1f0] sm:$0xff]
    %v138 = vld [vmem:[#allocation7 + $0x1f8] sm:$0xff]
    %v139 = vld [vmem:[#allocation7 + $0x200] sm:$0xff]
    %v140 = vld [vmem:[#allocation7 + $0x208] sm:$0xff]
    %v141 = vld [vmem:[#allocation7 + $0x210] sm:$0xff]
    %v142 = vld [vmem:[#allocation7 + $0x218] sm:$0xff]
    %v143 = vld [vmem:[#allocation7 + $0x220] sm:$0xff]
    %v144 = vld [vmem:[#allocation7 + $0x228] sm:$0xff]
    %v145 = vld [vmem:[#allocation7 + $0x230] sm:$0xff]
    %v146 = vld [vmem:[#allocation7 + $0x238] sm:$0xff]
    %v147 = vld [vmem:[#allocation7 + $0x240] sm:$0xff]
    %v148 = vld [vmem:[#allocation7 + $0x248] sm:$0xff]
    %v149 = vld [vmem:[#allocation7 + $0x250] sm:$0xff]
    %v150 = vld [vmem:[#allocation7 + $0x258] sm:$0xff]
    %v151 = vld [vmem:[#allocation7 + $0x260] sm:$0xff]
    %v152 = vld [vmem:[#allocation7 + $0x268] sm:$0xff]
    %v153 = vld [vmem:[#allocation7 + $0x270] sm:$0xff]
    %v154 = vld [vmem:[#allocation7 + $0x278] sm:$0xff]
    %v155 = vld [vmem:[#allocation7 + $0x280] sm:$0xff]
    %v156 = vld [vmem:[#allocation7 + $0x288] sm:$0xff]
    %v157 = vld [vmem:[#allocation7 + $0x290] sm:$0xff]
    %v158 = vld [vmem:[#allocation7 + $0x298] sm:$0xff]
    %v159 = vld [vmem:[#allocation7 + $0x2a0] sm:$0xff]
    %v160 = vld [vmem:[#allocation7 + $0x2a8] sm:$0xff]
    %v161 = vld [vmem:[#allocation7 + $0x2b0] sm:$0xff]
    %v162 = vld [vmem:[#allocation7 + $0x2b8] sm:$0xff]
    %v163 = vld [vmem:[#allocation7 + $0x2c0] sm:$0xff]
    %v164 = vld [vmem:[#allocation7 + $0x2c8] sm:$0xff]
    %v165 = vld [vmem:[#allocation7 + $0x2d0] sm:$0xff]
    %v166 = vld [vmem:[#allocation7 + $0x2d8] sm:$0xff]
    %v167 = vld [vmem:[#allocation7 + $0x2e0] sm:$0xff]
    %v168 = vld [vmem:[#allocation7 + $0x2e8] sm:$0xff]
    %v169 = vld [vmem:[#allocation7 + $0x2f0] sm:$0xff]
    %v170 = vld [vmem:[#allocation7 + $0x2f8] sm:$0xff]
    %v171 = vld [vmem:[#allocation7 + $0x300] sm:$0xff]
    %v172 = vld [vmem:[#allocation7 + $0x308] sm:$0xff]
    %v173 = vld [vmem:[#allocation7 + $0x310] sm:$0xff]
    %v174 = vld [vmem:[#allocation7 + $0x318] sm:$0xff]
    %v175 = vld [vmem:[#allocation7 + $0x320] sm:$0xff]
    %v176 = vld [vmem:[#allocation7 + $0x328] sm:$0xff]
    %v177 = vld [vmem:[#allocation7 + $0x330] sm:$0xff]
    %v178 = vld [vmem:[#allocation7 + $0x338] sm:$0xff]
    %v179 = vld [vmem:[#allocation5] sm:$0xff]
    %v180 = vld [vmem:[#allocation5 + $0x8] sm:$0xff]
    %v181 = vld [vmem:[#allocation5 + $0x10] sm:$0xff]
    %v182 = vld [vmem:[#allocation5 + $0x18] sm:$0xff]
    %v183 = vld [vmem:[#allocation5 + $0x20] sm:$0xff]
    %v184 = vld [vmem:[#allocation5 + $0x28] sm:$0xff]
    %v185 = vld [vmem:[#allocation5 + $0x30] sm:$0xff]
    %v186 = vld [vmem:[#allocation5 + $0x38] sm:$0xff]
    %v187 = vld [vmem:[#allocation5 + $0x40] sm:$0xff]
    %v188 = vld [vmem:[#allocation5 + $0x48] sm:$0xff]
    %v189 = vld [vmem:[#allocation5 + $0x50] sm:$0xff]
    %v190 = vld [vmem:[#allocation5 + $0x58] sm:$0xff]
    %v191 = vld [vmem:[#allocation5 + $0x60] sm:$0xff]
    %v192 = vld [vmem:[#allocation5 + $0x68] sm:$0xff]
    %v193 = vld [vmem:[#allocation5 + $0x70] sm:$0xff]
    %v194 = vld [vmem:[#allocation5 + $0x78] sm:$0xff]
    %v195 = vld [vmem:[#allocation5 + $0x80] sm:$0xff]
    %v196 = vld [vmem:[#allocation5 + $0x88] sm:$0xff]
    %v197 = vld [vmem:[#allocation5 + $0x90] sm:$0xff]
    %v198 = vld [vmem:[#allocation5 + $0x98] sm:$0xff]
    %v199 = vld [vmem:[#allocation5 + $0xa0] sm:$0xff]
    %v200 = vld [vmem:[#allocation5 + $0xa8] sm:$0xff]
    %v201 = vld [vmem:[#allocation5 + $0xb0] sm:$0xff]
    %v202 = vld [vmem:[#allocation5 + $0xb8] sm:$0xff]
    %v203 = vld [vmem:[#allocation5 + $0xc0] sm:$0xff]
    %v204 = vld [vmem:[#allocation5 + $0xc8] sm:$0xff]
    %v205 = vld [vmem:[#allocation5 + $0xd0] sm:$0xff]
    %v206 = vld [vmem:[#allocation5 + $0xd8] sm:$0xff]
    %v207 = vld [vmem:[#allocation5 + $0xe0] sm:$0xff]
    %v208 = vld [vmem:[#allocation5 + $0xe8] sm:$0xff]
    %v209 = vld [vmem:[#allocation5 + $0xf0] sm:$0xff]
    %v210 = vld [vmem:[#allocation5 + $0xf8] sm:$0xff]
    %v211 = vld [vmem:[#allocation5 + $0x100] sm:$0xff]
    %v212 = vld [vmem:[#allocation5 + $0x108] sm:$0xff]
    %v213 = vld [vmem:[#allocation5 + $0x110] sm:$0xff]
    %v214 = vld [vmem:[#allocation5 + $0x118] sm:$0xff]
    %v215 = vld [vmem:[#allocation5 + $0x120] sm:$0xff]
    %v216 = vld [vmem:[#allocation5 + $0x128] sm:$0xff]
    %v217 = vld [vmem:[#allocation5 + $0x130] sm:$0xff]
    %v218 = vld [vmem:[#allocation5 + $0x138] sm:$0xff]
    %v219 = vld [vmem:[#allocation5 + $0x140] sm:$0xff]
    %v220 = vld [vmem:[#allocation5 + $0x148] sm:$0xff]
    %v221 = vld [vmem:[#allocation5 + $0x150] sm:$0xff]
    %v222 = vld [vmem:[#allocation5 + $0x158] sm:$0xff]
    %v223 = vld [vmem:[#allocation5 + $0x160] sm:$0xff]
    %v224 = vld [vmem:[#allocation5 + $0x168] sm:$0xff]
    %v225 = vld [vmem:[#allocation5 + $0x170] sm:$0xff]
    %v226 = vld [vmem:[#allocation5 + $0x178] sm:$0xff]
    %v227 = vld [vmem:[#allocation5 + $0x180] sm:$0xff]
    %v228 = vld [vmem:[#allocation5 + $0x188] sm:$0xff]
    %v229 = vld [vmem:[#allocation5 + $0x190] sm:$0xff]
    %v230 = vld [vmem:[#allocation5 + $0x198] sm:$0xff]
    %v231 = vld [vmem:[#allocation5 + $0x1a0] sm:$0xff]
    %v232 = vld [vmem:[#allocation5 + $0x1a8] sm:$0xff]
    %v233 = vld [vmem:[#allocation5 + $0x1b0] sm:$0xff]
    %v234 = vld [vmem:[#allocation5 + $0x1b8] sm:$0xff]
    %v235 = vld [vmem:[#allocation5 + $0x1c0] sm:$0xff]
    %v236 = vld [vmem:[#allocation5 + $0x1c8] sm:$0xff]
    %v237 = vld [vmem:[#allocation5 + $0x1d0] sm:$0xff]
    %v238 = vld [vmem:[#allocation5 + $0x1d8] sm:$0xff]
    %v239 = vld [vmem:[#allocation5 + $0x1e0] sm:$0xff]
    %v240 = vld [vmem:[#allocation5 + $0x1e8] sm:$0xff]
    %v241 = vld [vmem:[#allocation5 + $0x1f0] sm:$0xff]
    %v242 = vld [vmem:[#allocation5 + $0x1f8] sm:$0xff]
    %v243 = vld [vmem:[#allocation5 + $0x200] sm:$0xff]
    %v244 = vld [vmem:[#allocation5 + $0x208] sm:$0xff]
    %v245 = vld [vmem:[#allocation5 + $0x210] sm:$0xff]
    %v246 = vld [vmem:[#allocation5 + $0x218] sm:$0xff]
    %v247 = vld [vmem:[#allocation5 + $0x220] sm:$0xff]
    %v248 = vld [vmem:[#allocation5 + $0x228] sm:$0xff]
    %v249 = vld [vmem:[#allocation5 + $0x230] sm:$0xff]
    %v250 = vld [vmem:[#allocation5 + $0x238] sm:$0xff]
    %v251 = vld [vmem:[#allocation5 + $0x240] sm:$0xff]
    %v252 = vld [vmem:[#allocation5 + $0x248] sm:$0xff]
    %v253 = vld [vmem:[#allocation5 + $0x250] sm:$0xff]
    %v254 = vld [vmem:[#allocation5 + $0x258] sm:$0xff]
    %v255 = vld [vmem:[#allocation5 + $0x260] sm:$0xff]
    %v256 = vld [vmem:[#allocation5 + $0x268] sm:$0xff]
    %v257 = vld [vmem:[#allocation5 + $0x270] sm:$0xff]
    %v258 = vld [vmem:[#allocation5 + $0x278] sm:$0xff]
    %v259 = vld [vmem:[#allocation5 + $0x280] sm:$0xff]
    %v260 = vld [vmem:[#allocation5 + $0x288] sm:$0xff]
    %v261 = vld [vmem:[#allocation5 + $0x290] sm:$0xff]
    %v262 = vld [vmem:[#allocation5 + $0x298] sm:$0xff]
    %v263 = vld [vmem:[#allocation5 + $0x2a0] sm:$0xff]
    %v264 = vld [vmem:[#allocation5 + $0x2a8] sm:$0xff]
    %v265 = vld [vmem:[#allocation5 + $0x2b0] sm:$0xff]
    %v266 = vld [vmem:[#allocation5 + $0x2b8] sm:$0xff]
    %v267 = vld [vmem:[#allocation5 + $0x2c0] sm:$0xff]
    %v268 = vld [vmem:[#allocation5 + $0x2c8] sm:$0xff]
    %v269 = vld [vmem:[#allocation5 + $0x2d0] sm:$0xff]
    %v270 = vld [vmem:[#allocation5 + $0x2d8] sm:$0xff]
    %v271 = vld [vmem:[#allocation5 + $0x2e0] sm:$0xff]
    %v272 = vld [vmem:[#allocation5 + $0x2e8] sm:$0xff]
    %v273 = vld [vmem:[#allocation5 + $0x2f0] sm:$0xff]
    %v274 = vld [vmem:[#allocation5 + $0x2f8] sm:$0xff]
    %v275 = vld [vmem:[#allocation5 + $0x300] sm:$0xff]
    %v276 = vld [vmem:[#allocation5 + $0x308] sm:$0xff]
    %v277 = vld [vmem:[#allocation5 + $0x310] sm:$0xff]
    %v278 = vld [vmem:[#allocation5 + $0x318] sm:$0xff]
    %v279 = vld [vmem:[#allocation5 + $0x320] sm:$0xff]
    %v280 = vld [vmem:[#allocation5 + $0x328] sm:$0xff]
    %v281 = vld [vmem:[#allocation5 + $0x330] sm:$0xff]
    %v282 = vld [vmem:[#allocation5 + $0x338] sm:$0xff]
    %v284 = vlaneseq
    %v285 = vshrl.u32 %v284, 7
    %v286 = vsub.s32 0, %v285
    %v287 = vrot.slane %v74, %v286
    %v288 = vlaneseq
    %v289 = vshrl.u32 %v288, 7
    %v290 = vsub.s32 1, %v289
    %v291 = vrot.slane %v74, %v290
    %v292 = vlaneseq
    %v293 = vshrl.u32 %v292, 7
    %v294 = vsub.s32 2, %v293
    %v295 = vrot.slane %v74, %v294
    %v296 = vlaneseq
    %v297 = vshrl.u32 %v296, 7
    %v298 = vsub.s32 3, %v297
    %v299 = vrot.slane %v74, %v298
    %v300 = vlaneseq
    %v301 = vshrl.u32 %v300, 7
    %v302 = vsub.s32 4, %v301
    %v303 = vrot.slane %v74, %v302
    %v304 = vlaneseq
    %v305 = vshrl.u32 %v304, 7
    %v306 = vsub.s32 5, %v305
    %v307 = vrot.slane %v74, %v306
    %v308 = vlaneseq
    %v309 = vshrl.u32 %v308, 7
    %v310 = vsub.s32 6, %v309
    %v311 = vrot.slane %v74, %v310
    %v312 = vlaneseq
    %v313 = vshrl.u32 %v312, 7
    %v314 = vsub.s32 7, %v313
    %v315 = vrot.slane %v74, %v314
    %v324 = vmul.f32 %v179, %v287
    %v325 = vmul.f32 %v180, %v291
    %v326 = vmul.f32 %v181, %v295
    %v327 = vmul.f32 %v182, %v299
    %v328 = vmul.f32 %v183, %v303
    %v329 = vmul.f32 %v184, %v307
    %v330 = vmul.f32 %v185, %v311
    %v331 = vmul.f32 %v186, %v315
    %v332 = vmul.f32 %v187, %v287
    %v333 = vmul.f32 %v188, %v291
    %v334 = vmul.f32 %v189, %v295
    %v335 = vmul.f32 %v190, %v299
    %v336 = vmul.f32 %v191, %v303
    %v337 = vmul.f32 %v192, %v307
    %v338 = vmul.f32 %v193, %v311
    %v339 = vmul.f32 %v194, %v315
    %v340 = vmul.f32 %v195, %v287
    %v341 = vmul.f32 %v196, %v291
    %v342 = vmul.f32 %v197, %v295
    %v343 = vmul.f32 %v198, %v299
    %v344 = vmul.f32 %v199, %v303
    %v345 = vmul.f32 %v200, %v307
    %v346 = vmul.f32 %v201, %v311
    %v347 = vmul.f32 %v202, %v315
    %v348 = vmul.f32 %v203, %v287
    %v349 = vmul.f32 %v204, %v291
    %v350 = vmul.f32 %v205, %v295
    %v351 = vmul.f32 %v206, %v299
    %v352 = vmul.f32 %v207, %v303
    %v353 = vmul.f32 %v208, %v307
    %v354 = vmul.f32 %v209, %v311
    %v355 = vmul.f32 %v210, %v315
    %v356 = vmul.f32 %v211, %v287
    %v357 = vmul.f32 %v212, %v291
    %v358 = vmul.f32 %v213, %v295
    %v359 = vmul.f32 %v214, %v299
    %v360 = vmul.f32 %v215, %v303
    %v361 = vmul.f32 %v216, %v307
    %v362 = vmul.f32 %v217, %v311
    %v363 = vmul.f32 %v218, %v315
    %v364 = vmul.f32 %v219, %v287
    %v365 = vmul.f32 %v220, %v291
    %v366 = vmul.f32 %v221, %v295
    %v367 = vmul.f32 %v222, %v299
    %v368 = vmul.f32 %v223, %v303
    %v369 = vmul.f32 %v224, %v307
    %v370 = vmul.f32 %v225, %v311
    %v371 = vmul.f32 %v226, %v315
    %v372 = vmul.f32 %v227, %v287
    %v373 = vmul.f32 %v228, %v291
    %v374 = vmul.f32 %v229, %v295
    %v375 = vmul.f32 %v230, %v299
    %v376 = vmul.f32 %v231, %v303
    %v377 = vmul.f32 %v232, %v307
    %v378 = vmul.f32 %v233, %v311
    %v379 = vmul.f32 %v234, %v315
    %v380 = vmul.f32 %v235, %v287
    %v381 = vmul.f32 %v236, %v291
    %v382 = vmul.f32 %v237, %v295
    %v383 = vmul.f32 %v238, %v299
    %v384 = vmul.f32 %v239, %v303
    %v385 = vmul.f32 %v240, %v307
    %v386 = vmul.f32 %v241, %v311
    %v387 = vmul.f32 %v242, %v315
    %v388 = vmul.f32 %v243, %v287
    %v389 = vmul.f32 %v244, %v291
    %v390 = vmul.f32 %v245, %v295
    %v391 = vmul.f32 %v246, %v299
    %v392 = vmul.f32 %v247, %v303
    %v393 = vmul.f32 %v248, %v307
    %v394 = vmul.f32 %v249, %v311
    %v395 = vmul.f32 %v250, %v315
    %v396 = vmul.f32 %v251, %v287
    %v397 = vmul.f32 %v252, %v291
    %v398 = vmul.f32 %v253, %v295
    %v399 = vmul.f32 %v254, %v299
    %v400 = vmul.f32 %v255, %v303
    %v401 = vmul.f32 %v256, %v307
    %v402 = vmul.f32 %v257, %v311
    %v403 = vmul.f32 %v258, %v315
    %v404 = vmul.f32 %v259, %v287
    %v405 = vmul.f32 %v260, %v291
    %v406 = vmul.f32 %v261, %v295
    %v407 = vmul.f32 %v262, %v299
    %v408 = vmul.f32 %v263, %v303
    %v409 = vmul.f32 %v264, %v307
    %v410 = vmul.f32 %v265, %v311
    %v411 = vmul.f32 %v266, %v315
    %v412 = vmul.f32 %v267, %v287
    %v413 = vmul.f32 %v268, %v291
    %v414 = vmul.f32 %v269, %v295
    %v415 = vmul.f32 %v270, %v299
    %v416 = vmul.f32 %v271, %v303
    %v417 = vmul.f32 %v272, %v307
    %v418 = vmul.f32 %v273, %v311
    %v419 = vmul.f32 %v274, %v315
    %v420 = vmul.f32 %v275, %v287
    %v421 = vmul.f32 %v276, %v291
    %v422 = vmul.f32 %v277, %v295
    %v423 = vmul.f32 %v278, %v299
    %v424 = vmul.f32 %v279, %v303
    %v425 = vmul.f32 %v280, %v307
    %v426 = vmul.f32 %v281, %v311
    %v427 = vmul.f32 %v282, %v315
    %v428 = vadd.f32 %v75, %v324
    %v429 = vadd.f32 %v76, %v325
    %v430 = vadd.f32 %v77, %v326
    %v431 = vadd.f32 %v78, %v327
    %v432 = vadd.f32 %v79, %v328
    %v433 = vadd.f32 %v80, %v329
    %v434 = vadd.f32 %v81, %v330
    %v435 = vadd.f32 %v82, %v331
    %v436 = vadd.f32 %v83, %v332
    %v437 = vadd.f32 %v84, %v333
    %v438 = vadd.f32 %v85, %v334
    %v439 = vadd.f32 %v86, %v335
    %v440 = vadd.f32 %v87, %v336
    %v441 = vadd.f32 %v88, %v337
    %v442 = vadd.f32 %v89, %v338
    %v443 = vadd.f32 %v90, %v339
    %v444 = vadd.f32 %v91, %v340
    %v445 = vadd.f32 %v92, %v341
    %v446 = vadd.f32 %v93, %v342
    %v447 = vadd.f32 %v94, %v343
    %v448 = vadd.f32 %v95, %v344
    %v449 = vadd.f32 %v96, %v345
    %v450 = vadd.f32 %v97, %v346
    %v451 = vadd.f32 %v98, %v347
    %v452 = vadd.f32 %v99, %v348
    %v453 = vadd.f32 %v100, %v349
    %v454 = vadd.f32 %v101, %v350
    %v455 = vadd.f32 %v102, %v351
    %v456 = vadd.f32 %v103, %v352
    %v457 = vadd.f32 %v104, %v353
    %v458 = vadd.f32 %v105, %v354
    %v459 = vadd.f32 %v106, %v355
    %v460 = vadd.f32 %v107, %v356
    %v461 = vadd.f32 %v108, %v357
    %v462 = vadd.f32 %v109, %v358
    %v463 = vadd.f32 %v110, %v359
    %v464 = vadd.f32 %v111, %v360
    %v465 = vadd.f32 %v112, %v361
    %v466 = vadd.f32 %v113, %v362
    %v467 = vadd.f32 %v114, %v363
    %v468 = vadd.f32 %v115, %v364
    %v469 = vadd.f32 %v116, %v365
    %v470 = vadd.f32 %v117, %v366
    %v471 = vadd.f32 %v118, %v367
    %v472 = vadd.f32 %v119, %v368
    %v473 = vadd.f32 %v120, %v369
    %v474 = vadd.f32 %v121, %v370
    %v475 = vadd.f32 %v122, %v371
    %v476 = vadd.f32 %v123, %v372
    %v477 = vadd.f32 %v124, %v373
    %v478 = vadd.f32 %v125, %v374
    %v479 = vadd.f32 %v126, %v375
    %v480 = vadd.f32 %v127, %v376
    %v481 = vadd.f32 %v128, %v377
    %v482 = vadd.f32 %v129, %v378
    %v483 = vadd.f32 %v130, %v379
    %v484 = vadd.f32 %v131, %v380
    %v485 = vadd.f32 %v132, %v381
    %v486 = vadd.f32 %v133, %v382
    %v487 = vadd.f32 %v134, %v383
    %v488 = vadd.f32 %v135, %v384
    %v489 = vadd.f32 %v136, %v385
    %v490 = vadd.f32 %v137, %v386
    %v491 = vadd.f32 %v138, %v387
    %v492 = vadd.f32 %v139, %v388
    %v493 = vadd.f32 %v140, %v389
    %v494 = vadd.f32 %v141, %v390
    %v495 = vadd.f32 %v142, %v391
    %v496 = vadd.f32 %v143, %v392
    %v497 = vadd.f32 %v144, %v393
    %v498 = vadd.f32 %v145, %v394
    %v499 = vadd.f32 %v146, %v395
    %v500 = vadd.f32 %v147, %v396
    %v501 = vadd.f32 %v148, %v397
    %v502 = vadd.f32 %v149, %v398
    %v503 = vadd.f32 %v150, %v399
    %v504 = vadd.f32 %v151, %v400
    %v505 = vadd.f32 %v152, %v401
    %v506 = vadd.f32 %v153, %v402
    %v507 = vadd.f32 %v154, %v403
    %v508 = vadd.f32 %v155, %v404
    %v509 = vadd.f32 %v156, %v405
    %v510 = vadd.f32 %v157, %v406
    %v511 = vadd.f32 %v158, %v407
    %v512 = vadd.f32 %v159, %v408
    %v513 = vadd.f32 %v160, %v409
    %v514 = vadd.f32 %v161, %v410
    %v515 = vadd.f32 %v162, %v411
    %v516 = vadd.f32 %v163, %v412
    %v517 = vadd.f32 %v164, %v413
    %v518 = vadd.f32 %v165, %v414
    %v519 = vadd.f32 %v166, %v415
    %v520 = vadd.f32 %v167, %v416
    %v521 = vadd.f32 %v168, %v417
    %v522 = vadd.f32 %v169, %v418
    %v523 = vadd.f32 %v170, %v419
    %v524 = vadd.f32 %v171, %v420
    %v525 = vadd.f32 %v172, %v421
    %v526 = vadd.f32 %v173, %v422
    %v527 = vadd.f32 %v174, %v423
    %v528 = vadd.f32 %v175, %v424
    %v529 = vadd.f32 %v176, %v425
    %v530 = vadd.f32 %v177, %v426
    %v531 = vadd.f32 %v178, %v427
    %v532 = vtanh.pop %v428
    %v533 = vtanh.pop %v429
    %v534 = vtanh.pop %v430
    %v535 = vtanh.pop %v431
    %v536 = vtanh.pop %v432
    %v537 = vtanh.pop %v433
    %v538 = vtanh.pop %v434
    %v539 = vtanh.pop %v435
    %v540 = vtanh.pop %v436
    %v541 = vtanh.pop %v437
    %v542 = vtanh.pop %v438
    %v543 = vtanh.pop %v439
    %v544 = vtanh.pop %v440
    %v545 = vtanh.pop %v441
    %v546 = vtanh.pop %v442
    %v547 = vtanh.pop %v443
    %v548 = vtanh.pop %v444
    %v549 = vtanh.pop %v445
    %v550 = vtanh.pop %v446
    %v551 = vtanh.pop %v447
    %v552 = vtanh.pop %v448
    %v553 = vtanh.pop %v449
    %v554 = vtanh.pop %v450
    %v555 = vtanh.pop %v451
    %v556 = vtanh.pop %v452
    %v557 = vtanh.pop %v453
    %v558 = vtanh.pop %v454
    %v559 = vtanh.pop %v455
    %v560 = vtanh.pop %v456
    %v561 = vtanh.pop %v457
    %v562 = vtanh.pop %v458
    %v563 = vtanh.pop %v459
    %v564 = vtanh.pop %v460
    %v565 = vtanh.pop %v461
    %v566 = vtanh.pop %v462
    %v567 = vtanh.pop %v463
    %v568 = vtanh.pop %v464
    %v569 = vtanh.pop %v465
    %v570 = vtanh.pop %v466
    %v571 = vtanh.pop %v467
    %v572 = vtanh.pop %v468
    %v573 = vtanh.pop %v469
    %v574 = vtanh.pop %v470
    %v575 = vtanh.pop %v471
    %v576 = vtanh.pop %v472
    %v577 = vtanh.pop %v473
    %v578 = vtanh.pop %v474
    %v579 = vtanh.pop %v475
    %v580 = vtanh.pop %v476
    %v581 = vtanh.pop %v477
    %v582 = vtanh.pop %v478
    %v583 = vtanh.pop %v479
    %v584 = vtanh.pop %v480
    %v585 = vtanh.pop %v481
    %v586 = vtanh.pop %v482
    %v587 = vtanh.pop %v483
    %v588 = vtanh.pop %v484
    %v589 = vtanh.pop %v485
    %v590 = vtanh.pop %v486
    %v591 = vtanh.pop %v487
    %v592 = vtanh.pop %v488
    %v593 = vtanh.pop %v489
    %v594 = vtanh.pop %v490
    %v595 = vtanh.pop %v491
    %v596 = vtanh.pop %v492
    %v597 = vtanh.pop %v493
    %v598 = vtanh.pop %v494
    %v599 = vtanh.pop %v495
    %v600 = vtanh.pop %v496
    %v601 = vtanh.pop %v497
    %v602 = vtanh.pop %v498
    %v603 = vtanh.pop %v499
    %v604 = vtanh.pop %v500
    %v605 = vtanh.pop %v501
    %v606 = vtanh.pop %v502
    %v607 = vtanh.pop %v503
    %v608 = vtanh.pop %v504
    %v609 = vtanh.pop %v505
    %v610 = vtanh.pop %v506
    %v611 = vtanh.pop %v507
    %v612 = vtanh.pop %v508
    %v613 = vtanh.pop %v509
    %v614 = vtanh.pop %v510
    %v615 = vtanh.pop %v511
    %v616 = vtanh.pop %v512
    %v617 = vtanh.pop %v513
    %v618 = vtanh.pop %v514
    %v619 = vtanh.pop %v515
    %v620 = vtanh.pop %v516
    %v621 = vtanh.pop %v517
    %v622 = vtanh.pop %v518
    %v623 = vtanh.pop %v519
    %v624 = vtanh.pop %v520
    %v625 = vtanh.pop %v521
    %v626 = vtanh.pop %v522
    %v627 = vtanh.pop %v523
    %v628 = vtanh.pop %v524
    %v629 = vtanh.pop %v525
    %v630 = vtanh.pop %v526
    %v631 = vtanh.pop %v527
    %v632 = vtanh.pop %v528
    %v633 = vtanh.pop %v529
    %v634 = vtanh.pop %v530
    %v635 = vtanh.pop %v531
    %v636 = vld [vmem:[#allocation8] sm:$0xff]
    %v637 = vld [vmem:[#allocation8 + $0x8] sm:$0xff]
    %v638 = vld [vmem:[#allocation8 + $0x10] sm:$0xff]
    %v639 = vld [vmem:[#allocation8 + $0x18] sm:$0xff]
    %v640 = vld [vmem:[#allocation8 + $0x20] sm:$0xff]
    %v641 = vld [vmem:[#allocation8 + $0x28] sm:$0xff]
    %v642 = vld [vmem:[#allocation8 + $0x30] sm:$0xff]
    %v643 = vld [vmem:[#allocation8 + $0x38] sm:$0xff]
    %v644 = vld [vmem:[#allocation8 + $0x40] sm:$0xff]
    %v645 = vld [vmem:[#allocation8 + $0x48] sm:$0xff]
    %v646 = vld [vmem:[#allocation8 + $0x50] sm:$0xff]
    %v647 = vld [vmem:[#allocation8 + $0x58] sm:$0xff]
    %v648 = vld [vmem:[#allocation8 + $0x60] sm:$0xff]
    %v649 = vld [vmem:[#allocation8 + $0x68] sm:$0xff]
    %v650 = vld [vmem:[#allocation8 + $0x70] sm:$0xff]
    %v651 = vld [vmem:[#allocation8 + $0x78] sm:$0xff]
    %v652 = vld [vmem:[#allocation8 + $0x80] sm:$0xff]
    %v653 = vld [vmem:[#allocation8 + $0x88] sm:$0xff]
    %v654 = vld [vmem:[#allocation8 + $0x90] sm:$0xff]
    %v655 = vld [vmem:[#allocation8 + $0x98] sm:$0xff]
    %v656 = vld [vmem:[#allocation8 + $0xa0] sm:$0xff]
    %v657 = vld [vmem:[#allocation8 + $0xa8] sm:$0xff]
    %v658 = vld [vmem:[#allocation8 + $0xb0] sm:$0xff]
    %v659 = vld [vmem:[#allocation8 + $0xb8] sm:$0xff]
    %v660 = vld [vmem:[#allocation8 + $0xc0] sm:$0xff]
    %v661 = vld [vmem:[#allocation8 + $0xc8] sm:$0xff]
    %v662 = vld [vmem:[#allocation8 + $0xd0] sm:$0xff]
    %v663 = vld [vmem:[#allocation8 + $0xd8] sm:$0xff]
    %v664 = vld [vmem:[#allocation8 + $0xe0] sm:$0xff]
    %v665 = vld [vmem:[#allocation8 + $0xe8] sm:$0xff]
    %v666 = vld [vmem:[#allocation8 + $0xf0] sm:$0xff]
    %v667 = vld [vmem:[#allocation8 + $0xf8] sm:$0xff]
    %v668 = vld [vmem:[#allocation8 + $0x100] sm:$0xff]
    %v669 = vld [vmem:[#allocation8 + $0x108] sm:$0xff]
    %v670 = vld [vmem:[#allocation8 + $0x110] sm:$0xff]
    %v671 = vld [vmem:[#allocation8 + $0x118] sm:$0xff]
    %v672 = vld [vmem:[#allocation8 + $0x120] sm:$0xff]
    %v673 = vld [vmem:[#allocation8 + $0x128] sm:$0xff]
    %v674 = vld [vmem:[#allocation8 + $0x130] sm:$0xff]
    %v675 = vld [vmem:[#allocation8 + $0x138] sm:$0xff]
    %v676 = vld [vmem:[#allocation8 + $0x140] sm:$0xff]
    %v677 = vld [vmem:[#allocation8 + $0x148] sm:$0xff]
    %v678 = vld [vmem:[#allocation8 + $0x150] sm:$0xff]
    %v679 = vld [vmem:[#allocation8 + $0x158] sm:$0xff]
    %v680 = vld [vmem:[#allocation8 + $0x160] sm:$0xff]
    %v681 = vld [vmem:[#allocation8 + $0x168] sm:$0xff]
    %v682 = vld [vmem:[#allocation8 + $0x170] sm:$0xff]
    %v683 = vld [vmem:[#allocation8 + $0x178] sm:$0xff]
    %v684 = vld [vmem:[#allocation8 + $0x180] sm:$0xff]
    %v685 = vld [vmem:[#allocation8 + $0x188] sm:$0xff]
    %v686 = vld [vmem:[#allocation8 + $0x190] sm:$0xff]
    %v687 = vld [vmem:[#allocation8 + $0x198] sm:$0xff]
    %v688 = vld [vmem:[#allocation8 + $0x1a0] sm:$0xff]
    %v689 = vld [vmem:[#allocation8 + $0x1a8] sm:$0xff]
    %v690 = vld [vmem:[#allocation8 + $0x1b0] sm:$0xff]
    %v691 = vld [vmem:[#allocation8 + $0x1b8] sm:$0xff]
    %v692 = vld [vmem:[#allocation8 + $0x1c0] sm:$0xff]
    %v693 = vld [vmem:[#allocation8 + $0x1c8] sm:$0xff]
    %v694 = vld [vmem:[#allocation8 + $0x1d0] sm:$0xff]
    %v695 = vld [vmem:[#allocation8 + $0x1d8] sm:$0xff]
    %v696 = vld [vmem:[#allocation8 + $0x1e0] sm:$0xff]
    %v697 = vld [vmem:[#allocation8 + $0x1e8] sm:$0xff]
    %v698 = vld [vmem:[#allocation8 + $0x1f0] sm:$0xff]
    %v699 = vld [vmem:[#allocation8 + $0x1f8] sm:$0xff]
    %v700 = vld [vmem:[#allocation8 + $0x200] sm:$0xff]
    %v701 = vld [vmem:[#allocation8 + $0x208] sm:$0xff]
    %v702 = vld [vmem:[#allocation8 + $0x210] sm:$0xff]
    %v703 = vld [vmem:[#allocation8 + $0x218] sm:$0xff]
    %v704 = vld [vmem:[#allocation8 + $0x220] sm:$0xff]
    %v705 = vld [vmem:[#allocation8 + $0x228] sm:$0xff]
    %v706 = vld [vmem:[#allocation8 + $0x230] sm:$0xff]
    %v707 = vld [vmem:[#allocation8 + $0x238] sm:$0xff]
    %v708 = vld [vmem:[#allocation8 + $0x240] sm:$0xff]
    %v709 = vld [vmem:[#allocation8 + $0x248] sm:$0xff]
    %v710 = vld [vmem:[#allocation8 + $0x250] sm:$0xff]
    %v711 = vld [vmem:[#allocation8 + $0x258] sm:$0xff]
    %v712 = vld [vmem:[#allocation8 + $0x260] sm:$0xff]
    %v713 = vld [vmem:[#allocation8 + $0x268] sm:$0xff]
    %v714 = vld [vmem:[#allocation8 + $0x270] sm:$0xff]
    %v715 = vld [vmem:[#allocation8 + $0x278] sm:$0xff]
    %v716 = vld [vmem:[#allocation8 + $0x280] sm:$0xff]
    %v717 = vld [vmem:[#allocation8 + $0x288] sm:$0xff]
    %v718 = vld [vmem:[#allocation8 + $0x290] sm:$0xff]
    %v719 = vld [vmem:[#allocation8 + $0x298] sm:$0xff]
    %v720 = vld [vmem:[#allocation8 + $0x2a0] sm:$0xff]
    %v721 = vld [vmem:[#allocation8 + $0x2a8] sm:$0xff]
    %v722 = vld [vmem:[#allocation8 + $0x2b0] sm:$0xff]
    %v723 = vld [vmem:[#allocation8 + $0x2b8] sm:$0xff]
    %v724 = vld [vmem:[#allocation8 + $0x2c0] sm:$0xff]
    %v725 = vld [vmem:[#allocation8 + $0x2c8] sm:$0xff]
    %v726 = vld [vmem:[#allocation8 + $0x2d0] sm:$0xff]
    %v727 = vld [vmem:[#allocation8 + $0x2d8] sm:$0xff]
    %v728 = vld [vmem:[#allocation8 + $0x2e0] sm:$0xff]
    %v729 = vld [vmem:[#allocation8 + $0x2e8] sm:$0xff]
    %v730 = vld [vmem:[#allocation8 + $0x2f0] sm:$0xff]
    %v731 = vld [vmem:[#allocation8 + $0x2f8] sm:$0xff]
    %v732 = vld [vmem:[#allocation8 + $0x300] sm:$0xff]
    %v733 = vld [vmem:[#allocation8 + $0x308] sm:$0xff]
    %v734 = vld [vmem:[#allocation8 + $0x310] sm:$0xff]
    %v735 = vld [vmem:[#allocation8 + $0x318] sm:$0xff]
    %v736 = vld [vmem:[#allocation8 + $0x320] sm:$0xff]
    %v737 = vld [vmem:[#allocation8 + $0x328] sm:$0xff]
    %v738 = vld [vmem:[#allocation8 + $0x330] sm:$0xff]
    %v739 = vld [vmem:[#allocation8 + $0x338] sm:$0xff]
    %v740 = vmul.f32 %v636, %v532
    %v741 = vmul.f32 %v637, %v533
    %v742 = vmul.f32 %v638, %v534
    %v743 = vmul.f32 %v639, %v535
    %v744 = vmul.f32 %v640, %v536
    %v745 = vmul.f32 %v641, %v537
    %v746 = vmul.f32 %v642, %v538
    %v747 = vmul.f32 %v643, %v539
    %v748 = vmul.f32 %v644, %v540
    %v749 = vmul.f32 %v645, %v541
    %v750 = vmul.f32 %v646, %v542
    %v751 = vmul.f32 %v647, %v543
    %v752 = vmul.f32 %v648, %v544
    %v753 = vmul.f32 %v649, %v545
    %v754 = vmul.f32 %v650, %v546
    %v755 = vmul.f32 %v651, %v547
    %v756 = vmul.f32 %v652, %v548
    %v757 = vmul.f32 %v653, %v549
    %v758 = vmul.f32 %v654, %v550
    %v759 = vmul.f32 %v655, %v551
    %v760 = vmul.f32 %v656, %v552
    %v761 = vmul.f32 %v657, %v553
    %v762 = vmul.f32 %v658, %v554
    %v763 = vmul.f32 %v659, %v555
    %v764 = vmul.f32 %v660, %v556
    %v765 = vmul.f32 %v661, %v557
    %v766 = vmul.f32 %v662, %v558
    %v767 = vmul.f32 %v663, %v559
    %v768 = vmul.f32 %v664, %v560
    %v769 = vmul.f32 %v665, %v561
    %v770 = vmul.f32 %v666, %v562
    %v771 = vmul.f32 %v667, %v563
    %v772 = vmul.f32 %v668, %v564
    %v773 = vmul.f32 %v669, %v565
    %v774 = vmul.f32 %v670, %v566
    %v775 = vmul.f32 %v671, %v567
    %v776 = vmul.f32 %v672, %v568
    %v777 = vmul.f32 %v673, %v569
    %v778 = vmul.f32 %v674, %v570
    %v779 = vmul.f32 %v675, %v571
    %v780 = vmul.f32 %v676, %v572
    %v781 = vmul.f32 %v677, %v573
    %v782 = vmul.f32 %v678, %v574
    %v783 = vmul.f32 %v679, %v575
    %v784 = vmul.f32 %v680, %v576
    %v785 = vmul.f32 %v681, %v577
    %v786 = vmul.f32 %v682, %v578
    %v787 = vmul.f32 %v683, %v579
    %v788 = vmul.f32 %v684, %v580
    %v789 = vmul.f32 %v685, %v581
    %v790 = vmul.f32 %v686, %v582
    %v791 = vmul.f32 %v687, %v583
    %v792 = vmul.f32 %v688, %v584
    %v793 = vmul.f32 %v689, %v585
    %v794 = vmul.f32 %v690, %v586
    %v795 = vmul.f32 %v691, %v587
    %v796 = vmul.f32 %v692, %v588
    %v797 = vmul.f32 %v693, %v589
    %v798 = vmul.f32 %v694, %v590
    %v799 = vmul.f32 %v695, %v591
    %v800 = vmul.f32 %v696, %v592
    %v801 = vmul.f32 %v697, %v593
    %v802 = vmul.f32 %v698, %v594
    %v803 = vmul.f32 %v699, %v595
    %v804 = vmul.f32 %v700, %v596
    %v805 = vmul.f32 %v701, %v597
    %v806 = vmul.f32 %v702, %v598
    %v807 = vmul.f32 %v703, %v599
    %v808 = vmul.f32 %v704, %v600
    %v809 = vmul.f32 %v705, %v601
    %v810 = vmul.f32 %v706, %v602
    %v811 = vmul.f32 %v707, %v603
    %v812 = vmul.f32 %v708, %v604
    %v813 = vmul.f32 %v709, %v605
    %v814 = vmul.f32 %v710, %v606
    %v815 = vmul.f32 %v711, %v607
    %v816 = vmul.f32 %v712, %v608
    %v817 = vmul.f32 %v713, %v609
    %v818 = vmul.f32 %v714, %v610
    %v819 = vmul.f32 %v715, %v611
    %v820 = vmul.f32 %v716, %v612
    %v821 = vmul.f32 %v717, %v613
    %v822 = vmul.f32 %v718, %v614
    %v823 = vmul.f32 %v719, %v615
    %v824 = vmul.f32 %v720, %v616
    %v825 = vmul.f32 %v721, %v617
    %v826 = vmul.f32 %v722, %v618
    %v827 = vmul.f32 %v723, %v619
    %v828 = vmul.f32 %v724, %v620
    %v829 = vmul.f32 %v725, %v621
    %v830 = vmul.f32 %v726, %v622
    %v831 = vmul.f32 %v727, %v623
    %v832 = vmul.f32 %v728, %v624
    %v833 = vmul.f32 %v729, %v625
    %v834 = vmul.f32 %v730, %v626
    %v835 = vmul.f32 %v731, %v627
    %v836 = vmul.f32 %v732, %v628
    %v837 = vmul.f32 %v733, %v629
    %v838 = vmul.f32 %v734, %v630
    %v839 = vmul.f32 %v735, %v631
    %v840 = vmul.f32 %v736, %v632
    %v841 = vmul.f32 %v737, %v633
    %v842 = vmul.f32 %v738, %v634
    %v843 = vmul.f32 %v739, %v635
    %v844 = vadd.f32 %v740, %v748
    %v845 = vadd.f32 %v844, %v756
    %v846 = vadd.f32 %v845, %v764
    %v847 = vadd.f32 %v846, %v772
    %v848 = vadd.f32 %v847, %v780
    %v849 = vadd.f32 %v848, %v788
    %v850 = vadd.f32 %v849, %v796
    %v851 = vadd.f32 %v850, %v804
    %v852 = vadd.f32 %v851, %v812
    %v853 = vadd.f32 %v852, %v820
    %v854 = vadd.f32 %v853, %v828
    %v855 = vadd.f32 %v854, %v836
    %v856 = vrot.slane %v855, 4
    %v857 = vadd.f32 %v855, %v856
    %v858 = vrot.slane %v857, 2
    %v859 = vadd.f32 %v857, %v858
    %v860 = vrot.slane %v859, 1
    %v861 = vadd.f32 %v859, %v860
    %v862 = vadd.f32 %v741, %v749
    %v863 = vadd.f32 %v862, %v757
    %v864 = vadd.f32 %v863, %v765
    %v865 = vadd.f32 %v864, %v773
    %v866 = vadd.f32 %v865, %v781
    %v867 = vadd.f32 %v866, %v789
    %v868 = vadd.f32 %v867, %v797
    %v869 = vadd.f32 %v868, %v805
    %v870 = vadd.f32 %v869, %v813
    %v871 = vadd.f32 %v870, %v821
    %v872 = vadd.f32 %v871, %v829
    %v873 = vadd.f32 %v872, %v837
    %v874 = vrot.slane %v873, 4
    %v875 = vadd.f32 %v873, %v874
    %v876 = vrot.slane %v875, 2
    %v877 = vadd.f32 %v875, %v876
    %v878 = vrot.slane %v877, 1
    %v879 = vadd.f32 %v877, %v878
    %v880 = vadd.f32 %v742, %v750
    %v881 = vadd.f32 %v880, %v758
    %v882 = vadd.f32 %v881, %v766
    %v883 = vadd.f32 %v882, %v774
    %v884 = vadd.f32 %v883, %v782
    %v885 = vadd.f32 %v884, %v790
    %v886 = vadd.f32 %v885, %v798
    %v887 = vadd.f32 %v886, %v806
    %v888 = vadd.f32 %v887, %v814
    %v889 = vadd.f32 %v888, %v822
    %v890 = vadd.f32 %v889, %v830
    %v891 = vadd.f32 %v890, %v838
    %v892 = vrot.slane %v891, 4
    %v893 = vadd.f32 %v891, %v892
    %v894 = vrot.slane %v893, 2
    %v895 = vadd.f32 %v893, %v894
    %v896 = vrot.slane %v895, 1
    %v897 = vadd.f32 %v895, %v896
    %v898 = vadd.f32 %v743, %v751
    %v899 = vadd.f32 %v898, %v759
    %v900 = vadd.f32 %v899, %v767
    %v901 = vadd.f32 %v900, %v775
    %v902 = vadd.f32 %v901, %v783
    %v903 = vadd.f32 %v902, %v791
    %v904 = vadd.f32 %v903, %v799
    %v905 = vadd.f32 %v904, %v807
    %v906 = vadd.f32 %v905, %v815
    %v907 = vadd.f32 %v906, %v823
    %v908 = vadd.f32 %v907, %v831
    %v909 = vadd.f32 %v908, %v839
    %v910 = vrot.slane %v909, 4
    %v911 = vadd.f32 %v909, %v910
    %v912 = vrot.slane %v911, 2
    %v913 = vadd.f32 %v911, %v912
    %v914 = vrot.slane %v913, 1
    %v915 = vadd.f32 %v913, %v914
    %v916 = vadd.f32 %v744, %v752
    %v917 = vadd.f32 %v916, %v760
    %v918 = vadd.f32 %v917, %v768
    %v919 = vadd.f32 %v918, %v776
    %v920 = vadd.f32 %v919, %v784
    %v921 = vadd.f32 %v920, %v792
    %v922 = vadd.f32 %v921, %v800
    %v923 = vadd.f32 %v922, %v808
    %v924 = vadd.f32 %v923, %v816
    %v925 = vadd.f32 %v924, %v824
    %v926 = vadd.f32 %v925, %v832
    %v927 = vadd.f32 %v926, %v840
    %v928 = vrot.slane %v927, 4
    %v929 = vadd.f32 %v927, %v928
    %v930 = vrot.slane %v929, 2
    %v931 = vadd.f32 %v929, %v930
    %v932 = vrot.slane %v931, 1
    %v933 = vadd.f32 %v931, %v932
    %v934 = vadd.f32 %v745, %v753
    %v935 = vadd.f32 %v934, %v761
    %v936 = vadd.f32 %v935, %v769
    %v937 = vadd.f32 %v936, %v777
    %v938 = vadd.f32 %v937, %v785
    %v939 = vadd.f32 %v938, %v793
    %v940 = vadd.f32 %v939, %v801
    %v941 = vadd.f32 %v940, %v809
    %v942 = vadd.f32 %v941, %v817
    %v943 = vadd.f32 %v942, %v825
    %v944 = vadd.f32 %v943, %v833
    %v945 = vadd.f32 %v944, %v841
    %v946 = vrot.slane %v945, 4
    %v947 = vadd.f32 %v945, %v946
    %v948 = vrot.slane %v947, 2
    %v949 = vadd.f32 %v947, %v948
    %v950 = vrot.slane %v949, 1
    %v951 = vadd.f32 %v949, %v950
    %v952 = vadd.f32 %v746, %v754
    %v953 = vadd.f32 %v952, %v762
    %v954 = vadd.f32 %v953, %v770
    %v955 = vadd.f32 %v954, %v778
    %v956 = vadd.f32 %v955, %v786
    %v957 = vadd.f32 %v956, %v794
    %v958 = vadd.f32 %v957, %v802
    %v959 = vadd.f32 %v958, %v810
    %v960 = vadd.f32 %v959, %v818
    %v961 = vadd.f32 %v960, %v826
    %v962 = vadd.f32 %v961, %v834
    %v963 = vadd.f32 %v962, %v842
    %v964 = vrot.slane %v963, 4
    %v965 = vadd.f32 %v963, %v964
    %v966 = vrot.slane %v965, 2
    %v967 = vadd.f32 %v965, %v966
    %v968 = vrot.slane %v967, 1
    %v969 = vadd.f32 %v967, %v968
    %v970 = vadd.f32 %v747, %v755
    %v971 = vadd.f32 %v970, %v763
    %v972 = vadd.f32 %v971, %v771
    %v973 = vadd.f32 %v972, %v779
    %v974 = vadd.f32 %v973, %v787
    %v975 = vadd.f32 %v974, %v795
    %v976 = vadd.f32 %v975, %v803
    %v977 = vadd.f32 %v976, %v811
    %v978 = vadd.f32 %v977, %v819
    %v979 = vadd.f32 %v978, %v827
    %v980 = vadd.f32 %v979, %v835
    %v981 = vadd.f32 %v980, %v843
    %v982 = vrot.slane %v981, 4
    %v983 = vadd.f32 %v981, %v982
    %v984 = vrot.slane %v983, 2
    %v985 = vadd.f32 %v983, %v984
    %v986 = vrot.slane %v985, 1
    %v987 = vadd.f32 %v985, %v986
    %v988 = vld [vmem:[%s4] sm:$0xff]
    %v990 = vlaneseq
    %v991 = vshrl.u32 %v990, 7
    %v992 = vsub.s32 0, %v991
    %v993 = vrot.slane %v988, %v992
    %v994 = vlaneseq
    %v995 = vshrl.u32 %v994, 7
    %v996 = vsub.s32 1, %v995
    %v997 = vrot.slane %v988, %v996
    %v998 = vlaneseq
    %v999 = vshrl.u32 %v998, 7
    %v1000 = vsub.s32 2, %v999
    %v1001 = vrot.slane %v988, %v1000
    %v1002 = vlaneseq
    %v1003 = vshrl.u32 %v1002, 7
    %v1004 = vsub.s32 3, %v1003
    %v1005 = vrot.slane %v988, %v1004
    %v1006 = vlaneseq
    %v1007 = vshrl.u32 %v1006, 7
    %v1008 = vsub.s32 4, %v1007
    %v1009 = vrot.slane %v988, %v1008
    %v1010 = vlaneseq
    %v1011 = vshrl.u32 %v1010, 7
    %v1012 = vsub.s32 5, %v1011
    %v1013 = vrot.slane %v988, %v1012
    %v1014 = vlaneseq
    %v1015 = vshrl.u32 %v1014, 7
    %v1016 = vsub.s32 6, %v1015
    %v1017 = vrot.slane %v988, %v1016
    %v1018 = vlaneseq
    %v1019 = vshrl.u32 %v1018, 7
    %v1020 = vsub.s32 7, %v1019
    %v1021 = vrot.slane %v988, %v1020
    %v1030 = vadd.f32 %v861, %v993
    %v1031 = vadd.f32 %v879, %v997
    %v1032 = vadd.f32 %v897, %v1001
    %v1033 = vadd.f32 %v915, %v1005
    %v1034 = vadd.f32 %v933, %v1009
    %v1035 = vadd.f32 %v951, %v1013
    %v1036 = vadd.f32 %v969, %v1017
    %v1037 = vadd.f32 %v987, %v1021
    %v1046 = vcombine.low %v1030, %v1031
    %v1047 = vcombine.low %v1032, %v1033
    %v1048 = vcombine.low %v1034, %v1035
    %v1049 = vcombine.low %v1036, %v1037
    %v1051 = vunpack.c.l.s4 1966171168
    %v1052 = vunpack.c.0.s8 %v1051
    %v1053 = vlaneseq
    %v1054 = vshrl.u32 %v1053, 7
    %v1055 = vsub.s32 %v1052, %v1054
    %v1056 = vrot.slane %v1046, %v1055
    %v1058 = vunpack.c.l.s4 1966171168
    %v1059 = vunpack.c.0.s8 %v1058
    %v1060 = vlaneseq
    %v1061 = vshrl.u32 %v1060, 7
    %v1062 = vsub.s32 %v1059, %v1061
    %v1063 = vrot.slane %v1047, %v1062
    %v1065 = vunpack.c.l.s4 1966171168
    %v1066 = vunpack.c.0.s8 %v1065
    %v1067 = vlaneseq
    %v1068 = vshrl.u32 %v1067, 7
    %v1069 = vsub.s32 %v1066, %v1068
    %v1070 = vrot.slane %v1048, %v1069
    %v1072 = vunpack.c.l.s4 1966171168
    %v1073 = vunpack.c.0.s8 %v1072
    %v1074 = vlaneseq
    %v1075 = vshrl.u32 %v1074, 7
    %v1076 = vsub.s32 %v1073, %v1075
    %v1077 = vrot.slane %v1049, %v1076
    %v1078 = vcombine.low %v1056, %v1063
    %v1079 = vcombine.low %v1070, %v1077
    %v1081 = vunpack.c.l.s4 1966171168
    %v1082 = vunpack.c.0.s8 %v1081
    %v1083 = vlaneseq
    %v1084 = vshrl.u32 %v1083, 7
    %v1085 = vsub.s32 %v1082, %v1084
    %v1086 = vrot.slane %v1078, %v1085
    %v1088 = vunpack.c.l.s4 1966171168
    %v1089 = vunpack.c.0.s8 %v1088
    %v1090 = vlaneseq
    %v1091 = vshrl.u32 %v1090, 7
    %v1092 = vsub.s32 %v1089, %v1091
    %v1093 = vrot.slane %v1079, %v1092
    %v1094 = vcombine.low %v1086, %v1093
    %1096 = vst [vmem:[#allocation10] sm:$0xff] %v1094
    // Predicated region
    $region38: #{tpu_custom_call.1} parent=1 // pred_check
      _
    $region39: #{tpu_custom_call.1} parent=1 // pred_check_branch
      %1098 = sbr.rel (0) target = $region41
    $region40: #{tpu_custom_call.1} parent=1 // pred_region
      %s1100 = ssub.s32 128, 128
      %1101 = vsyncadd [#allocation4], %s1100
      %s1103 = sshll.u32 [#allocation10], 4
      %s1104 = int_to_ptr.vmem [resolvable:$true] %s1103
      %1106 = dma.vmem_to_hbm [thread:$0]  %s1104, 128, %s5, [#allocation4]
    $region41: #{tpu_custom_call.1} parent=1 // pred_fallthru
      _
    // Predicated region
    $region42: #{tpu_custom_call.1} parent=1 // pred_check
      _
    $region43: #{tpu_custom_call.1} parent=1 // pred_check_branch
      %1108 = sbr.rel (0) target = $region45
    $region44: #{tpu_custom_call.1} parent=1 // pred_region
      %1109 = dma.done [#allocation4], 128
    $region45: #{tpu_custom_call.1} parent=1 // pred_fallthru
      _
    %1110 = vsyncpa [#allocation3], 1
    %1111 = vsyncpa [#allocation6], 1
    %1112 = vsyncpa [#allocation9], 1
    %1113 = vsyncpa [#allocation4], 1

</llo_original>
